<compile_context>
chip_gen: v5e
topology: v5e:2x2
jax: 0.10.0
libtpu: 0.0.40
codegen_flags: <defaults>
</compile_context>

<pallas_src>
import jax
import jax.numpy as jnp
from jax import lax
from jax.experimental import pallas as pl
from jax.experimental.pallas import tpu as pltpu


def mlp_kernel(x_ref, w1_ref, w2_ref, w3_ref, w4_ref, b_ref, o_ref):
    # x_ref: (TILE_B, in_dim). Contract the feature dim of x directly (rhs-transposed
    # matmul) so the result is (30, TILE_B): batch lives on the lane axis from here on.
    x = x_ref[...]

    h = lax.dot_general(w1_ref[...], x, (((1,), (1,)), ((), ())),
                        preferred_element_type=jnp.float32)        # (30, TILE_B)
    h = jnp.maximum(h + b_ref[0:30, 0:1], 0.0)

    h = jnp.dot(w2_ref[...], h, preferred_element_type=jnp.float32)  # (10, TILE_B)
    h = jnp.maximum(h + b_ref[0:10, 1:2], 0.0)

    h = jnp.dot(w3_ref[...], h, preferred_element_type=jnp.float32)  # (10, TILE_B)
    h = jnp.maximum(h + b_ref[0:10, 2:3], 0.0)

    logits = jnp.dot(w4_ref[...], h, preferred_element_type=jnp.float32)  # (1, TILE_B)
    # o_ref is (1, 1, TILE_B); o_ref[0] is the (1, TILE_B) lane-dense row.
    o_ref[0] = jax.nn.sigmoid(logits + b_ref[0:1, 3:4])


def _round_up(n, m):
    return ((n + m - 1) // m) * m


def mlp_forward(x, params, *, tile_b=4096):
    """x: (B, input_dim) float32. Returns (B,) float32, matching torch's squeeze(-1)."""
    w1, w2, w3, w4, b_stack = params
    B, in_dim = x.shape
    x = x.astype(jnp.float32)

    # Batch tile: multiple of 128 so the (1, tile_b) output row is lane-dense.
    # Clamp so the grid keeps >=2 steps when possible (v7x megacore sharding);
    # harmless on v5e/v6e. No HBM copy of x for ragged batches: the tail block
    # reads out-of-bounds rows, whose independent per-lane results are discarded.
    tile_b = max(128, min(int(tile_b), _round_up(-(-B // 2), 128)))
    tile_b = _round_up(tile_b, 128)
    grid_b = pl.cdiv(B, tile_b)

    # Weights/biases: full-array blocks with a constant index_map -> fetched once,
    # VMEM-resident for the entire grid.
    resident = lambda a: pl.BlockSpec(a.shape, lambda i: (0,) * a.ndim)

    out = pl.pallas_call(
        mlp_kernel,
        out_shape=jax.ShapeDtypeStruct((grid_b, 1, tile_b), jnp.float32),
        grid=(grid_b,),
        in_specs=[
            pl.BlockSpec((tile_b, in_dim), lambda i: (i, 0)),   # x, pipelined over batch
            resident(w1), resident(w2), resident(w3), resident(w4),
            resident(b_stack),
        ],
        out_specs=pl.BlockSpec((1, 1, tile_b), lambda i: (i, 0, 0)),  # lane-dense row
        compiler_params=pltpu.CompilerParams(
            dimension_semantics=("parallel",),      # megacore sharding on v7x
            vmem_limit_bytes=32 * 1024 * 1024,      # plenty; safe on v5e/v6e/v7x
        ),
    )(x, w1, w2, w3, w4, b_stack)
    return out.reshape(-1)[:B]   # drop tail-block garbage + squeeze(-1)


def init_params(key, input_dim):
    """nn.Linear-style init: U(-1/sqrt(fan_in), 1/sqrt(fan_in)).
    Weights stored PyTorch-style as (out, in) so the kernel computes W @ x^T; the
    four biases are packed column-wise into one zero-padded (30, 4) array so they
    slice directly into (out, 1) sublane-broadcast form."""
    dims = [(input_dim, 30), (30, 10), (10, 10), (10, 1)]
    max_out = max(o for _, o in dims)  # 30
    weights, bias_cols = [], []
    for fan_in, fan_out in dims:
        key, kw, kb = jax.random.split(key, 3)
        bound = 1.0 / (fan_in ** 0.5)
        weights.append(jax.random.uniform(kw, (fan_out, fan_in), jnp.float32, -bound, bound))
        b = jax.random.uniform(kb, (fan_out,), jnp.float32, -bound, bound)
        bias_cols.append(jnp.pad(b, (0, max_out - fan_out)))
    b_stack = jnp.stack(bias_cols, axis=1)  # (30, 4)
    return (*weights, b_stack)


if __name__ == "__main__":
    key = jax.random.PRNGKey(0)
    key, kx = jax.random.split(key)

    # Small synthetic shapes; input_dim stands in for len(features.columns).
    # batch=300 with the default tile (clamped to 256) exercises a 2-step grid
    # and the ragged last-block path.
    batch, input_dim = 300, 16
    x = jax.random.normal(kx, (batch, input_dim), jnp.float32)
    params = init_params(key, input_dim)

    y = mlp_forward(x, params)
    jax.block_until_ready(y)

    # Reference check in plain JAX (weights are (out, in); biases packed (30, 4)).
    w1, w2, w3, w4, b = params
    r = jnp.maximum(x @ w1.T + b[:30, 0], 0.0)
    r = jnp.maximum(r @ w2.T + b[:10, 1], 0.0)
    r = jnp.maximum(r @ w3.T + b[:10, 2], 0.0)
    r = jax.nn.sigmoid(r @ w4.T + b[:1, 3])[:, 0]

    assert y.shape == (batch,)
    assert jnp.allclose(y, r, atol=1e-4), "mismatch vs reference"

    print("KERNEL_OK")
</pallas_src>

<mosaic_0001>
module attributes {stable_mosaic.version = 11 : i64} {
  func.func @mlp_kernel(%arg0: i32, %arg1: memref<256x16xf32, #tpu.memory_space<vmem>>, %arg2: memref<30x16xf32, #tpu.memory_space<vmem>>, %arg3: memref<10x30xf32, #tpu.memory_space<vmem>>, %arg4: memref<10x10xf32, #tpu.memory_space<vmem>>, %arg5: memref<1x10xf32, #tpu.memory_space<vmem>>, %arg6: memref<30x4xf32, #tpu.memory_space<vmem>>, %arg7: memref<1x1x256xf32, #tpu.memory_space<vmem>>) attributes {dimension_semantics = [#tpu.dimension_semantics<parallel>], iteration_bounds = array<i64: 2>, scalar_prefetch = 0 : i64, scratch_operands = 0 : i64, tpu.core_type = #tpu.core_type<tc>, window_params = [{transform_indices = @transform_0, window_bounds = array<i64: 256, 16>}, {pipeline_mode = #tpu.pipeline_mode<synchronous>, transform_indices = @transform_1, window_bounds = array<i64: 30, 16>}, {pipeline_mode = #tpu.pipeline_mode<synchronous>, transform_indices = @transform_2, window_bounds = array<i64: 10, 30>}, {pipeline_mode = #tpu.pipeline_mode<synchronous>, transform_indices = @transform_3, window_bounds = array<i64: 10, 10>}, {pipeline_mode = #tpu.pipeline_mode<synchronous>, transform_indices = @transform_4, window_bounds = array<i64: 1, 10>}, {pipeline_mode = #tpu.pipeline_mode<synchronous>, transform_indices = @transform_5, window_bounds = array<i64: 30, 4>}, {transform_indices = @transform_6, window_bounds = array<i64: 1, 1, 256>}]} {
    %c0 = arith.constant 0 : index
    %c0_0 = arith.constant 0 : index
    %0 = vector.load %arg1[%c0, %c0_0] : memref<256x16xf32, #tpu.memory_space<vmem>>, vector<256x16xf32>
    %c0_1 = arith.constant 0 : index
    %c0_2 = arith.constant 0 : index
    %1 = vector.load %arg2[%c0_1, %c0_2] : memref<30x16xf32, #tpu.memory_space<vmem>>, vector<30x16xf32>
    %cst = arith.constant dense<0.000000e+00> : vector<30x256xf32>
    %2 = tpu.matmul %1, %0, %cst {dimension_numbers = #tpu.dot_dimension_numbers<[1], [1], [0], [0], [0, 0, 1, 0], [], []>} : vector<30x16xf32>, vector<256x16xf32>, vector<30x256xf32> -> vector<30x256xf32>
    %c0_3 = arith.constant 0 : index
    %c0_4 = arith.constant 0 : index
    %3 = vector.load %arg6[%c0_3, %c0_4] : memref<30x4xf32, #tpu.memory_space<vmem>>, vector<30x1xf32>
    %4 = vector.broadcast %3 : vector<30x1xf32> to vector<30x256xf32>
    %5 = arith.addf %2, %4 : vector<30x256xf32>
    %cst_5 = arith.constant 0.000000e+00 : f32
    %6 = vector.broadcast %cst_5 : f32 to vector<30x256xf32>
    %7 = arith.maximumf %5, %6 : vector<30x256xf32>
    %c0_6 = arith.constant 0 : index
    %c0_7 = arith.constant 0 : index
    %8 = vector.load %arg3[%c0_6, %c0_7] : memref<10x30xf32, #tpu.memory_space<vmem>>, vector<10x30xf32>
    %cst_8 = arith.constant dense<0.000000e+00> : vector<10x256xf32>
    %9 = tpu.matmul %8, %7, %cst_8 {dimension_numbers = #tpu.dot_dimension_numbers<[1], [0], [0], [1], [0, 0, 1, 1], [], []>} : vector<10x30xf32>, vector<30x256xf32>, vector<10x256xf32> -> vector<10x256xf32>
    %c0_9 = arith.constant 0 : index
    %c1 = arith.constant 1 : index
    %10 = vector.load %arg6[%c0_9, %c1] : memref<30x4xf32, #tpu.memory_space<vmem>>, vector<10x1xf32>
    %11 = vector.broadcast %10 : vector<10x1xf32> to vector<10x256xf32>
    %12 = arith.addf %9, %11 : vector<10x256xf32>
    %cst_10 = arith.constant 0.000000e+00 : f32
    %13 = vector.broadcast %cst_10 : f32 to vector<10x256xf32>
    %14 = arith.maximumf %12, %13 : vector<10x256xf32>
    %c0_11 = arith.constant 0 : index
    %c0_12 = arith.constant 0 : index
    %15 = vector.load %arg4[%c0_11, %c0_12] : memref<10x10xf32, #tpu.memory_space<vmem>>, vector<10x10xf32>
    %cst_13 = arith.constant dense<0.000000e+00> : vector<10x256xf32>
    %16 = tpu.matmul %15, %14, %cst_13 {dimension_numbers = #tpu.dot_dimension_numbers<[1], [0], [0], [1], [0, 0, 1, 1], [], []>} : vector<10x10xf32>, vector<10x256xf32>, vector<10x256xf32> -> vector<10x256xf32>
    %c0_14 = arith.constant 0 : index
    %c2 = arith.constant 2 : index
    %17 = vector.load %arg6[%c0_14, %c2] : memref<30x4xf32, #tpu.memory_space<vmem>>, vector<10x1xf32>
    %18 = vector.broadcast %17 : vector<10x1xf32> to vector<10x256xf32>
    %19 = arith.addf %16, %18 : vector<10x256xf32>
    %cst_15 = arith.constant 0.000000e+00 : f32
    %20 = vector.broadcast %cst_15 : f32 to vector<10x256xf32>
    %21 = arith.maximumf %19, %20 : vector<10x256xf32>
    %c0_16 = arith.constant 0 : index
    %c0_17 = arith.constant 0 : index
    %22 = vector.load %arg5[%c0_16, %c0_17] : memref<1x10xf32, #tpu.memory_space<vmem>>, vector<1x10xf32>
    %cst_18 = arith.constant dense<0.000000e+00> : vector<1x256xf32>
    %23 = tpu.matmul %22, %21, %cst_18 {dimension_numbers = #tpu.dot_dimension_numbers<[1], [0], [0], [1], [0, 0, 1, 1], [], []>} : vector<1x10xf32>, vector<10x256xf32>, vector<1x256xf32> -> vector<1x256xf32>
    %c0_19 = arith.constant 0 : index
    %c3 = arith.constant 3 : index
    %24 = vector.load %arg6[%c0_19, %c3] : memref<30x4xf32, #tpu.memory_space<vmem>>, vector<1x1xf32>
    %25 = vector.broadcast %24 : vector<1x1xf32> to vector<1x256xf32>
    %26 = arith.addf %23, %25 : vector<1x256xf32>
    %27 = arith.negf %26 : vector<1x256xf32>
    %28 = math.exp %27 : vector<1x256xf32>
    %cst_20 = arith.constant 1.000000e+00 : f32
    %29 = vector.broadcast %cst_20 : f32 to vector<1x256xf32>
    %30 = arith.addf %29, %28 : vector<1x256xf32>
    %31 = arith.divf %29, %30 : vector<1x256xf32>
    %c0_21 = arith.constant 0 : index
    %c0_22 = arith.constant 0 : index
    %c0_23 = arith.constant 0 : index
    %32 = vector.load %arg7[%c0_21, %c0_22, %c0_23] : memref<1x1x256xf32, #tpu.memory_space<vmem>>, vector<1x1x256xf32>
    %33 = vector.shape_cast %32 : vector<1x1x256xf32> to vector<1x256xf32>
    %34 = vector.shape_cast %31 : vector<1x256xf32> to vector<1x1x256xf32>
    tpu.vector_store %arg7[%c0_21, %c0_22, %c0_23], %34 {strides = array<i32>} : memref<1x1x256xf32, #tpu.memory_space<vmem>>, vector<1x1x256xf32>,
    return
  }
  func.func @transform_0(%arg0: i32) -> (i32, i32) {
    %c0_i32 = arith.constant 0 : i32
    %c0_i32_0 = arith.constant 0 : i32
    return %arg0, %c0_i32 : i32, i32
  }
  func.func @transform_1(%arg0: i32) -> (i32, i32) {
    %c0_i32 = arith.constant 0 : i32
    %c0_i32_0 = arith.constant 0 : i32
    %c0_i32_1 = arith.constant 0 : i32
    return %c0_i32, %c0_i32_0 : i32, i32
  }
  func.func @transform_2(%arg0: i32) -> (i32, i32) {
    %c0_i32 = arith.constant 0 : i32
    %c0_i32_0 = arith.constant 0 : i32
    %c0_i32_1 = arith.constant 0 : i32
    return %c0_i32, %c0_i32_0 : i32, i32
  }
  func.func @transform_3(%arg0: i32) -> (i32, i32) {
    %c0_i32 = arith.constant 0 : i32
    %c0_i32_0 = arith.constant 0 : i32
    %c0_i32_1 = arith.constant 0 : i32
    return %c0_i32, %c0_i32_0 : i32, i32
  }
  func.func @transform_4(%arg0: i32) -> (i32, i32) {
    %c0_i32 = arith.constant 0 : i32
    %c0_i32_0 = arith.constant 0 : i32
    %c0_i32_1 = arith.constant 0 : i32
    return %c0_i32, %c0_i32_0 : i32, i32
  }
  func.func @transform_5(%arg0: i32) -> (i32, i32) {
    %c0_i32 = arith.constant 0 : i32
    %c0_i32_0 = arith.constant 0 : i32
    %c0_i32_1 = arith.constant 0 : i32
    return %c0_i32, %c0_i32_0 : i32, i32
  }
  func.func @transform_6(%arg0: i32) -> (i32, i32, i32) {
    %c0_i32 = arith.constant 0 : i32
    %c0_i32_0 = arith.constant 0 : i32
    %c0_i32_1 = arith.constant 0 : i32
    return %arg0, %c0_i32, %c0_i32_0 : i32, i32, i32
  }
}

</mosaic_0001>

<llo_original>
// kernel: tpu_custom_call.1
$region0: #{tpu_custom_call.1}
  #allocation0 [shape = 'u32[]', space=smem, size = 0x4, offset = 0x4, fixed_abs, tag = 'smem constant byte address 0x4 - core index']
  #allocation1 [shape = 'u32[72,128]{1,0:T(1,128)}', space=vmem, size = 0x9000, scoped, tag = 'internal scratch']
  %s0 = inlined_call_operand.vmem [shape: f32[300,16], index: 0, kind: input, shape index: {}]
  %s1 = inlined_call_operand.vmem [shape: f32[30,16], index: 1, kind: input, shape index: {}]
  %s2 = inlined_call_operand.vmem [shape: f32[10,30], index: 2, kind: input, shape index: {}]
  %s3 = inlined_call_operand.vmem [shape: f32[10,10], index: 3, kind: input, shape index: {}]
  %s4 = inlined_call_operand.vmem [shape: f32[1,10], index: 4, kind: input, shape index: {}]
  %s5 = inlined_call_operand.vmem [shape: f32[30,4], index: 5, kind: input, shape index: {}]
  %s6 = inlined_call_operand.hbm [shape: f32[2,1,256], index: 6, kind: output, shape index: {}]
  %s7 = sld [smem:[#allocation0]]
  $region57: #{tpu_custom_call.1} parent=0
    _
  %s9 = ssub.s32 1, %s7
  %s10 = scalar_select 0, %s9, %s7
  $region1: #{tpu_custom_call.1} parent=0
    #allocation2 [shape = 'u8[2048]{0}', space=vmem, size = 0x800, scoped, tag = 'output window, operand 0']
    #allocation3 [shape = 's32[2]{0}', space=sflag, size = 0x8, scoped, tag = 'scoped memory for tpu_custom_call.1']
    %11 = vsyncpa [#allocation3], 0
    %s12 = scalar_lea.sflag [#allocation3], 1
    %13 = vsyncpa %s12, 0
    loop: start=0, step=1, limit=4
    $region2: #{tpu_custom_call.1} parent=1 // loop_pre_header
      _
    $region3: #{tpu_custom_call.1} parent=1 // loop_header
      %s15 = sphi 0, %s19
      %p16 = scmp.ge.s32.totalorder %s15, 4
      %s25 = sphi 0, %s27
      %s28 = sphi 0, %s25
      %s29 = sphi 0, %s28
      %s45 = sphi 0, %s29
      %s49 = sphi 0, %s49
      %s51 = sphi 0, %s49
      %s52 = sphi 0, %s51
      %s66 = sphi 0, %s52
      %s70 = sphi 0, %s70
      %s72 = sphi 0, %s70
      %s73 = sphi 0, %s72
      %s87 = sphi 0, %s73
      %s91 = sphi 0, %s91
      %s93 = sphi 0, %s91
      %s94 = sphi 0, %s93
      %s108 = sphi 0, %s94
      %s112 = sphi 0, %s112
      %s114 = sphi 0, %s112
      %s115 = sphi 0, %s114
      %s129 = sphi 0, %s115
      %s133 = sphi 0, %s133
      %s135 = sphi 0, %s133
      %s136 = sphi 0, %s135
      %s150 = sphi 0, %s136
      %s156 = sphi 0, %s158
      %s159 = sphi 0, %s156
      %s160 = sphi 0, %s159
      %s176 = sphi 0, %s160
    $region4: #{tpu_custom_call.1} parent=1 // loop_header_branch
      %18 = sbr.rel (%p16) target = $region8
    $region5: #{tpu_custom_call.1} parent=1 // loop_body
      %s20 = ssub.s32 %s15, 1
      %s21 = ssub.s32 %s15, 2
      %s22 = sadd.s32 %s15, 1
      %s23 = ssub.s32 %s15, %s22
      %p24 = scmp.eq.s32.totalorder %s23, 0
      %s26 = sadd.s32 %s25, 1
      %s27 = scalar_select %p24, %s25, %s26
      %p30 = pneg %p24
      %p31 = scmp.eq.s32.totalorder %s15, 1
      %p32 = por %p30, %p31
      %p33 = scmp.ne.s32.totalorder %s25, %s28
      %p34 = scmp.eq.s32.totalorder %s15, 0
      %p35 = por %p33, %p34
      %p36 = scmp.ne.s32.totalorder %s25, %s28
      %p37 = scmp.eq.s32.totalorder %s20, 1
      %p38 = por %p36, %p37
      %p39 = scmp.ne.s32.totalorder %s28, %s29
      %p40 = scmp.eq.s32.totalorder %s20, 0
      %p41 = por %p39, %p40
      %p42 = scmp.ne.s32.totalorder %s28, %s29
      %p43 = scmp.eq.s32.totalorder %s21, 1
      %p44 = por %p42, %p43
      %p46 = scmp.ne.s32.totalorder %s29, %s45
      %p47 = scmp.eq.s32.totalorder %s21, 0
      %p48 = por %p46, %p47
      %s50 = sadd.s32 %s49, 1
      %p53 = scmp.eq.s32.totalorder %s15, 1
      %p54 = scmp.ne.s32.totalorder %s49, %s51
      %p55 = scmp.eq.s32.totalorder %s15, 0
      %p56 = por %p54, %p55
      %p57 = scmp.ne.s32.totalorder %s49, %s51
      %p58 = scmp.eq.s32.totalorder %s20, 1
      %p59 = por %p57, %p58
      %p60 = scmp.ne.s32.totalorder %s51, %s52
      %p61 = scmp.eq.s32.totalorder %s20, 0
      %p62 = por %p60, %p61
      %p63 = scmp.ne.s32.totalorder %s51, %s52
      %p64 = scmp.eq.s32.totalorder %s21, 1
      %p65 = por %p63, %p64
      %p67 = scmp.ne.s32.totalorder %s52, %s66
      %p68 = scmp.eq.s32.totalorder %s21, 0
      %p69 = por %p67, %p68
      %s71 = sadd.s32 %s70, 1
      %p74 = scmp.eq.s32.totalorder %s15, 1
      %p75 = scmp.ne.s32.totalorder %s70, %s72
      %p76 = scmp.eq.s32.totalorder %s15, 0
      %p77 = por %p75, %p76
      %p78 = scmp.ne.s32.totalorder %s70, %s72
      %p79 = scmp.eq.s32.totalorder %s20, 1
      %p80 = por %p78, %p79
      %p81 = scmp.ne.s32.totalorder %s72, %s73
      %p82 = scmp.eq.s32.totalorder %s20, 0
      %p83 = por %p81, %p82
      %p84 = scmp.ne.s32.totalorder %s72, %s73
      %p85 = scmp.eq.s32.totalorder %s21, 1
      %p86 = por %p84, %p85
      %p88 = scmp.ne.s32.totalorder %s73, %s87
      %p89 = scmp.eq.s32.totalorder %s21, 0
      %p90 = por %p88, %p89
      %s92 = sadd.s32 %s91, 1
      %p95 = scmp.eq.s32.totalorder %s15, 1
      %p96 = scmp.ne.s32.totalorder %s91, %s93
      %p97 = scmp.eq.s32.totalorder %s15, 0
      %p98 = por %p96, %p97
      %p99 = scmp.ne.s32.totalorder %s91, %s93
      %p100 = scmp.eq.s32.totalorder %s20, 1
      %p101 = por %p99, %p100
      %p102 = scmp.ne.s32.totalorder %s93, %s94
      %p103 = scmp.eq.s32.totalorder %s20, 0
      %p104 = por %p102, %p103
      %p105 = scmp.ne.s32.totalorder %s93, %s94
      %p106 = scmp.eq.s32.totalorder %s21, 1
      %p107 = por %p105, %p106
      %p109 = scmp.ne.s32.totalorder %s94, %s108
      %p110 = scmp.eq.s32.totalorder %s21, 0
      %p111 = por %p109, %p110
      %s113 = sadd.s32 %s112, 1
      %p116 = scmp.eq.s32.totalorder %s15, 1
      %p117 = scmp.ne.s32.totalorder %s112, %s114
      %p118 = scmp.eq.s32.totalorder %s15, 0
      %p119 = por %p117, %p118
      %p120 = scmp.ne.s32.totalorder %s112, %s114
      %p121 = scmp.eq.s32.totalorder %s20, 1
      %p122 = por %p120, %p121
      %p123 = scmp.ne.s32.totalorder %s114, %s115
      %p124 = scmp.eq.s32.totalorder %s20, 0
      %p125 = por %p123, %p124
      %p126 = scmp.ne.s32.totalorder %s114, %s115
      %p127 = scmp.eq.s32.totalorder %s21, 1
      %p128 = por %p126, %p127
      %p130 = scmp.ne.s32.totalorder %s115, %s129
      %p131 = scmp.eq.s32.totalorder %s21, 0
      %p132 = por %p130, %p131
      %s134 = sadd.s32 %s133, 1
      %p137 = scmp.eq.s32.totalorder %s15, 1
      %p138 = scmp.ne.s32.totalorder %s133, %s135
      %p139 = scmp.eq.s32.totalorder %s15, 0
      %p140 = por %p138, %p139
      %p141 = scmp.ne.s32.totalorder %s133, %s135
      %p142 = scmp.eq.s32.totalorder %s20, 1
      %p143 = por %p141, %p142
      %p144 = scmp.ne.s32.totalorder %s135, %s136
      %p145 = scmp.eq.s32.totalorder %s20, 0
      %p146 = por %p144, %p145
      %p147 = scmp.ne.s32.totalorder %s135, %s136
      %p148 = scmp.eq.s32.totalorder %s21, 1
      %p149 = por %p147, %p148
      %p151 = scmp.ne.s32.totalorder %s136, %s150
      %p152 = scmp.eq.s32.totalorder %s21, 0
      %p153 = por %p151, %p152
      %s154 = ssub.s32 %s15, %s22
      %p155 = scmp.eq.s32.totalorder %s154, 0
      %s157 = sadd.s32 %s156, 1
      %s158 = scalar_select %p155, %s156, %s157
      %p161 = pneg %p155
      %p162 = scmp.eq.s32.totalorder %s15, 1
      %p163 = por %p161, %p162
      %p164 = scmp.ne.s32.totalorder %s156, %s159
      %p165 = scmp.eq.s32.totalorder %s15, 0
      %p166 = por %p164, %p165
      %p167 = scmp.ne.s32.totalorder %s156, %s159
      %p168 = scmp.eq.s32.totalorder %s20, 1
      %p169 = por %p167, %p168
      %p170 = scmp.ne.s32.totalorder %s159, %s160
      %p171 = scmp.eq.s32.totalorder %s20, 0
      %p172 = por %p170, %p171
      %p173 = scmp.ne.s32.totalorder %s159, %s160
      %p174 = scmp.eq.s32.totalorder %s21, 1
      %p175 = por %p173, %p174
      %p177 = scmp.ne.s32.totalorder %s160, %s176
      %p178 = scmp.eq.s32.totalorder %s21, 0
      %p179 = por %p177, %p178
      %p180 = scmp.le.s32.totalorder 1, %s15
      %p181 = scmp.lt.s32.totalorder %s15, 3
      %p182 = pnand %p180, %p181
      %p183 = pneg %p182
      // Predicated region
      $region9: #{tpu_custom_call.1} parent=5 // pred_check
        _
      $region10: #{tpu_custom_call.1} parent=5 // pred_check_branch
        %185 = sbr.rel (%p182) target = $region12
      $region11: #{tpu_custom_call.1} parent=5 // pred_region
        %s186 = ssub.s32 %s15, 1
        // Predicated region
        $region13: #{tpu_custom_call.1} parent=11 // pred_check
          %p187 = pneg %p62
        $region14: #{tpu_custom_call.1} parent=11 // pred_check_branch
          %189 = sbr.rel (%p187) target = $region16
        $region15: #{tpu_custom_call.1} parent=11 // pred_region
          _
        $region16: #{tpu_custom_call.1} parent=11 // pred_fallthru
          _
        // Predicated region
        $region17: #{tpu_custom_call.1} parent=11 // pred_check
          %p190 = pneg %p83
        $region18: #{tpu_custom_call.1} parent=11 // pred_check_branch
          %192 = sbr.rel (%p190) target = $region20
        $region19: #{tpu_custom_call.1} parent=11 // pred_region
          _
        $region20: #{tpu_custom_call.1} parent=11 // pred_fallthru
          _
        // Predicated region
        $region21: #{tpu_custom_call.1} parent=11 // pred_check
          %p193 = pneg %p104
        $region22: #{tpu_custom_call.1} parent=11 // pred_check_branch
          %195 = sbr.rel (%p193) target = $region24
        $region23: #{tpu_custom_call.1} parent=11 // pred_region
          _
        $region24: #{tpu_custom_call.1} parent=11 // pred_fallthru
          _
        // Predicated region
        $region25: #{tpu_custom_call.1} parent=11 // pred_check
          %p196 = pneg %p125
        $region26: #{tpu_custom_call.1} parent=11 // pred_check_branch
          %198 = sbr.rel (%p196) target = $region28
        $region27: #{tpu_custom_call.1} parent=11 // pred_region
          _
        $region28: #{tpu_custom_call.1} parent=11 // pred_fallthru
          _
        // Predicated region
        $region29: #{tpu_custom_call.1} parent=11 // pred_check
          %p199 = pneg %p146
        $region30: #{tpu_custom_call.1} parent=11 // pred_check_branch
          %201 = sbr.rel (%p199) target = $region32
        $region31: #{tpu_custom_call.1} parent=11 // pred_region
          _
        $region32: #{tpu_custom_call.1} parent=11 // pred_fallthru
          _
      $region12: #{tpu_custom_call.1} parent=5 // pred_fallthru
        _
      %p202 = scmp.lt.s32.totalorder %s15, 2
      // Predicated region
      $region33: #{tpu_custom_call.1} parent=5 // pred_check
        %p203 = pneg %p202
      $region34: #{tpu_custom_call.1} parent=5 // pred_check_branch
        %205 = sbr.rel (%p203) target = $region36
      $region35: #{tpu_custom_call.1} parent=5 // pred_region
        // Predicated region
        $region37: #{tpu_custom_call.1} parent=35 // pred_check
          %p206 = pneg %p35
        $region38: #{tpu_custom_call.1} parent=35 // pred_check_branch
          %208 = sbr.rel (%p206) target = $region40
        $region39: #{tpu_custom_call.1} parent=35 // pred_region
          %s209 = smul.u32 32, %s15
          %s210 = ssub.s32 38, %s209
          %p211 = scmp.lt.s32.totalorder %s210, 32
          %s212 = scalar_select %p211, %s210, 32
          %s213 = smul.u32 8, %s212
          %p214 = scmp.lt.s32.totalorder %s209, 37
          %s215 = scalar_select %p214, %s209, 37
          %s216 = smul.addr %s215, 8
          %s217 = scalar_lea.vmem %s0, %s216
          %s218 = smul.u32 32, %s15
          %s219 = ssub.s32 38, %s218
          %p220 = scmp.lt.s32.totalorder %s219, 32
          %s221 = scalar_select %p220, %s219, 32
          %s222 = smul.u32 8, %s221
        $region40: #{tpu_custom_call.1} parent=35 // pred_fallthru
          _
      $region36: #{tpu_custom_call.1} parent=5 // pred_fallthru
        _
      %p223 = scmp.le.s32.totalorder 1, %s15
      %p224 = scmp.lt.s32.totalorder %s15, 3
      %p225 = pnand %p223, %p224
      %p226 = pneg %p225
      // Predicated region
      $region41: #{tpu_custom_call.1} parent=5 // pred_check
        _
      $region42: #{tpu_custom_call.1} parent=5 // pred_check_branch
        %228 = sbr.rel (%p225) target = $region44
      $region43: #{tpu_custom_call.1} parent=5 // pred_region
        %s229 = ssub.s32 %s15, 1
        %s230 = smul.u32 32, %s20
        %s231 = ssub.s32 38, %s230
        %p232 = scmp.lt.s32.totalorder %s231, 32
        %s233 = scalar_select %p232, %s231, 32
        %s234 = smul.u32 8, %s233
        %p235 = scmp.lt.s32.totalorder %s230, 37
        %s236 = scalar_select %p235, %s230, 37
        %s237 = smul.addr %s236, 8
        %s238 = scalar_lea.vmem %s0, %s237
        %p239 = pneg %p41
        %p240 = pneg %p38
        %p241 = pneg %p62
        %p242 = pneg %p59
        %p243 = pneg %p83
        %p244 = pneg %p80
        %p245 = pneg %p104
        %p246 = pneg %p101
        %p247 = pneg %p125
        %p248 = pneg %p122
        %p249 = pneg %p146
        %p250 = pneg %p143
        %p251 = pneg %p172
        %p252 = pneg %p169
        %s253 = sand.u32 %s159, 1
        %s254 = scalar_lea.sflag [#allocation3], %s253
        %s255 = sand.u32 %s159, 1
        %s256 = smul.addr %s255, 2
        %s257 = scalar_lea.vmem [#allocation2], %s256
        %s258 = smul.u32 32, %s20
        %s259 = ssub.s32 38, %s258
        %p260 = scmp.lt.s32.totalorder %s259, 32
        %s261 = scalar_select %p260, %s259, 32
        %s262 = smul.u32 8, %s261
        %p263 = scmp.lt.s32.totalorder %s258, 37
        %s264 = scalar_select %p263, %s258, 37
        %s265 = smul.addr %s264, 8
        %s266 = scalar_lea.vmem %s0, %s265
        %s267 = smul.u32 32, %s20
        %s268 = ssub.s32 38, %s267
        %p269 = scmp.lt.s32.totalorder %s268, 32
        %s270 = scalar_select %p269, %s268, 32
        %s271 = smul.u32 8, %s270
        %v272 = vld [vmem:[%s266] sm:$0xff]
        %v273 = vld [vmem:[%s266 + $0x8] sm:$0xff]
        %v274 = vld [vmem:[%s266 + $0x10] sm:$0xff]
        %v275 = vld [vmem:[%s266 + $0x18] sm:$0xff]
        %v276 = vld [vmem:[%s266 + $0x20] sm:$0xff]
        %v277 = vld [vmem:[%s266 + $0x28] sm:$0xff]
        %v278 = vld [vmem:[%s266 + $0x30] sm:$0xff]
        %v279 = vld [vmem:[%s266 + $0x38] sm:$0xff]
        %v280 = vld [vmem:[%s266 + $0x40] sm:$0xff]
        %v281 = vld [vmem:[%s266 + $0x48] sm:$0xff]
        %v282 = vld [vmem:[%s266 + $0x50] sm:$0xff]
        %v283 = vld [vmem:[%s266 + $0x58] sm:$0xff]
        %v284 = vld [vmem:[%s266 + $0x60] sm:$0xff]
        %v285 = vld [vmem:[%s266 + $0x68] sm:$0xff]
        %v286 = vld [vmem:[%s266 + $0x70] sm:$0xff]
        %v287 = vld [vmem:[%s266 + $0x78] sm:$0xff]
        %v288 = vld [vmem:[%s266 + $0x80] sm:$0xff]
        %v289 = vld [vmem:[%s266 + $0x88] sm:$0xff]
        %v290 = vld [vmem:[%s266 + $0x90] sm:$0xff]
        %v291 = vld [vmem:[%s266 + $0x98] sm:$0xff]
        %v292 = vld [vmem:[%s266 + $0xa0] sm:$0xff]
        %v293 = vld [vmem:[%s266 + $0xa8] sm:$0xff]
        %v294 = vld [vmem:[%s266 + $0xb0] sm:$0xff]
        %v295 = vld [vmem:[%s266 + $0xb8] sm:$0xff]
        %v296 = vld [vmem:[%s266 + $0xc0] sm:$0xff]
        %v297 = vld [vmem:[%s266 + $0xc8] sm:$0xff]
        %v298 = vld [vmem:[%s266 + $0xd0] sm:$0xff]
        %v299 = vld [vmem:[%s266 + $0xd8] sm:$0xff]
        %v300 = vld [vmem:[%s266 + $0xe0] sm:$0xff]
        %v301 = vld [vmem:[%s266 + $0xe8] sm:$0xff]
        %v302 = vld [vmem:[%s266 + $0xf0] sm:$0xff]
        %v303 = vld [vmem:[%s266 + $0xf8] sm:$0xff]
        %v304 = vld [vmem:[%s1] sm:$0xff]
        %v305 = vld [vmem:[%s1 + $0x8] sm:$0xff]
        %v306 = vld [vmem:[%s1 + $0x10] sm:$0xff]
        %v307 = vld [vmem:[%s1 + $0x18] sm:$0x3f]
        %v308 = vld [vmem:[%s5] sm:$0xff]
        %v309 = vld [vmem:[%s5 + $0x8] sm:$0xff]
        %v310 = vld [vmem:[%s5 + $0x10] sm:$0xff]
        %v311 = vld [vmem:[%s5 + $0x18] sm:$0x3f]
        %313 = vset.pattern.permute.xlu0 0
        %314 = vperm.xlu0 %313, %v308
        %v315 = vpop.permute.xlu0 %314
        %318 = vset.pattern.permute.xlu0 0
        %319 = vperm.xlu0 %318, %v309
        %v320 = vpop.permute.xlu0 %319
        %323 = vset.pattern.permute.xlu0 0
        %324 = vperm.xlu0 %323, %v310
        %v325 = vpop.permute.xlu0 %324
        %328 = vset.pattern.permute.xlu0 0
        %329 = vperm.xlu0 %328, %v311
        %v330 = vpop.permute.xlu0 %329
        %vm332 = vcmask 130048
        %v334 = vsel %vm332, %v304, 0
        %v337 = vsel %vm332, %v305, 0
        %v340 = vsel %vm332, %v306, 0
        %v343 = vsel %vm332, %v307, 0
        %v346 = vsel %vm332, %v272, 0
        %v349 = vsel %vm332, %v273, 0
        %v352 = vsel %vm332, %v274, 0
        %v355 = vsel %vm332, %v275, 0
        %v358 = vsel %vm332, %v276, 0
        %v361 = vsel %vm332, %v277, 0
        %v364 = vsel %vm332, %v278, 0
        %v367 = vsel %vm332, %v279, 0
        %v370 = vsel %vm332, %v280, 0
        %v373 = vsel %vm332, %v281, 0
        %v376 = vsel %vm332, %v282, 0
        %v379 = vsel %vm332, %v283, 0
        %v382 = vsel %vm332, %v284, 0
        %v385 = vsel %vm332, %v285, 0
        %v388 = vsel %vm332, %v286, 0
        %v391 = vsel %vm332, %v287, 0
        %v394 = vsel %vm332, %v288, 0
        %v397 = vsel %vm332, %v289, 0
        %v400 = vsel %vm332, %v290, 0
        %v403 = vsel %vm332, %v291, 0
        %v406 = vsel %vm332, %v292, 0
        %v409 = vsel %vm332, %v293, 0
        %v412 = vsel %vm332, %v294, 0
        %v415 = vsel %vm332, %v295, 0
        %v418 = vsel %vm332, %v296, 0
        %v421 = vsel %vm332, %v297, 0
        %v424 = vsel %vm332, %v298, 0
        %v427 = vsel %vm332, %v299, 0
        %v430 = vsel %vm332, %v300, 0
        %v433 = vsel %vm332, %v301, 0
        %v436 = vsel %vm332, %v302, 0
        %v439 = vsel %vm332, %v303, 0
        %441 = vmatpush.xpose.msra.mxu0 %v391
        %442 = vmatpush.xpose.msra.mxu0 %v388
        %443 = vmatpush.xpose.msra.mxu0 %v385
        %444 = vmatpush.xpose.msra.mxu0 %v382
        %445 = vmatpush.xpose.msra.mxu0 %v379
        %446 = vmatpush.xpose.msra.mxu0 %v376
        %447 = vmatpush.xpose.msra.mxu0 %v373
        %448 = vmatpush.xpose.msra.mxu0 %v370
        %449 = vmatpush.xpose.msra.mxu0 %v367
        %450 = vmatpush.xpose.msra.mxu0 %v364
        %451 = vmatpush.xpose.msra.mxu0 %v361
        %452 = vmatpush.xpose.msra.mxu0 %v358
        %453 = vmatpush.xpose.msra.mxu0 %v355
        %454 = vmatpush.xpose.msra.mxu0 %v352
        %455 = vmatpush.xpose.msra.mxu0 %v349
        %456 = vmatpush.xpose.msra.mxu0 %v346
        %457 = vmatmul.f32.gmra.mxu0 %v334
        %v458 = vpop.f32.mrf.mxu0
        %v459 = vadd.f32 %v315, %v458
        %460 = vmatmul.f32.gmra.mxu0 %v337
        %v461 = vpop.f32.mrf.mxu0
        %v462 = vadd.f32 %v320, %v461
        %463 = vmatmul.f32.gmra.mxu0 %v340
        %v464 = vpop.f32.mrf.mxu0
        %v465 = vadd.f32 %v325, %v464
        %466 = vmatmul.f32.gmra.mxu0 %v343
        %v467 = vpop.f32.mrf.mxu0
        %v468 = vadd.f32 %v330, %v467
        %469 = vdwg.mxu0
        %470 = vmatpush.xpose.msra.mxu0 %v439
        %471 = vmatpush.xpose.msra.mxu0 %v436
        %472 = vmatpush.xpose.msra.mxu0 %v433
        %473 = vmatpush.xpose.msra.mxu0 %v430
        %474 = vmatpush.xpose.msra.mxu0 %v427
        %475 = vmatpush.xpose.msra.mxu0 %v424
        %476 = vmatpush.xpose.msra.mxu0 %v421
        %477 = vmatpush.xpose.msra.mxu0 %v418
        %478 = vmatpush.xpose.msra.mxu0 %v415
        %479 = vmatpush.xpose.msra.mxu0 %v412
        %480 = vmatpush.xpose.msra.mxu0 %v409
        %481 = vmatpush.xpose.msra.mxu0 %v406
        %482 = vmatpush.xpose.msra.mxu0 %v403
        %483 = vmatpush.xpose.msra.mxu0 %v400
        %484 = vmatpush.xpose.msra.mxu0 %v397
        %485 = vmatpush.xpose.msra.mxu0 %v394
        %486 = vmatmul.f32.gmra.mxu0 %v334
        %v487 = vpop.f32.mrf.mxu0
        %v488 = vadd.f32 %v315, %v487
        %489 = vmatmul.f32.gmra.mxu0 %v337
        %v490 = vpop.f32.mrf.mxu0
        %v491 = vadd.f32 %v320, %v490
        %492 = vmatmul.f32.gmra.mxu0 %v340
        %v493 = vpop.f32.mrf.mxu0
        %v494 = vadd.f32 %v325, %v493
        %495 = vmatmul.f32.gmra.mxu0 %v343
        %v496 = vpop.f32.mrf.mxu0
        %v497 = vadd.f32 %v330, %v496
        %498 = vdwg.mxu0
        %v499 = vmax.f32 %v459, 0.0
        %v500 = vmax.f32 %v488, 0.0
        %v501 = vmax.f32 %v462, 0.0
        %v502 = vmax.f32 %v491, 0.0
        %v503 = vmax.f32 %v465, 0.0
        %v504 = vmax.f32 %v494, 0.0
        %v505 = vmax.f32 %v468, 0.0
        %v506 = vmax.f32 %v497, 0.0
        %v507 = vld [vmem:[%s2] sm:$0xff]
        %v508 = vld [vmem:[%s2 + $0x8] sm:$0x3]
        %v509 = vld [vmem:[%s5] sm:$0xff]
        %v510 = vld [vmem:[%s5 + $0x8] sm:$0x3]
        %512 = vset.pattern.permute.xlu0 1
        %513 = vperm.xlu0 %512, %v509
        %v514 = vpop.permute.xlu0 %513
        %517 = vset.pattern.permute.xlu0 1
        %518 = vperm.xlu0 %517, %v510
        %v519 = vpop.permute.xlu0 %518
        %vm521 = vcmask 244736
        %v523 = vsel %vm521, %v507, 0
        %v526 = vsel %vm521, %v508, 0
        %vm528 = vcmask 1045504
        %v530 = vsel %vm528, %v505, 0
        %v533 = vsel %vm528, %v506, 0
        %535 = vmatpush.msra.mxu0 0.0
        %536 = vmatpush.msra.mxu0 0.0
        %537 = vmatpush.msra.mxu0 0.0
        %538 = vmatpush.msra.mxu0 0.0
        %539 = vmatpush.msra.mxu0 0.0
        %540 = vmatpush.msra.mxu0 0.0
        %541 = vmatpush.msra.mxu0 0.0
        %542 = vmatpush.msra.mxu0 0.0
        %543 = vmatpush.msra.mxu0 0.0
        %544 = vmatpush.msra.mxu0 0.0
        %545 = vmatpush.msra.mxu0 0.0
        %546 = vmatpush.msra.mxu0 0.0
        %547 = vmatpush.msra.mxu0 %v530
        %548 = vmatpush.msra.mxu0 %v503
        %549 = vmatpush.msra.mxu0 %v501
        %550 = vmatpush.msra.mxu0 %v499
        %551 = vmatmul.f32.gmra.mxu0 %v523
        %v552 = vpop.f32.mrf.mxu0
        %v553 = vadd.f32 %v514, %v552
        %554 = vmatmul.f32.gmra.mxu0 %v526
        %v555 = vpop.f32.mrf.mxu0
        %v556 = vadd.f32 %v519, %v555
        %557 = vdwg.mxu0
        %558 = vmatpush.msra.mxu0 0.0
        %559 = vmatpush.msra.mxu0 0.0
        %560 = vmatpush.msra.mxu0 0.0
        %561 = vmatpush.msra.mxu0 0.0
        %562 = vmatpush.msra.mxu0 0.0
        %563 = vmatpush.msra.mxu0 0.0
        %564 = vmatpush.msra.mxu0 0.0
        %565 = vmatpush.msra.mxu0 0.0
        %566 = vmatpush.msra.mxu0 0.0
        %567 = vmatpush.msra.mxu0 0.0
        %568 = vmatpush.msra.mxu0 0.0
        %569 = vmatpush.msra.mxu0 0.0
        %570 = vmatpush.msra.mxu0 %v533
        %571 = vmatpush.msra.mxu0 %v504
        %572 = vmatpush.msra.mxu0 %v502
        %573 = vmatpush.msra.mxu0 %v500
        %574 = vmatmul.f32.gmra.mxu0 %v523
        %v575 = vpop.f32.mrf.mxu0
        %v576 = vadd.f32 %v514, %v575
        %577 = vmatmul.f32.gmra.mxu0 %v526
        %v578 = vpop.f32.mrf.mxu0
        %v579 = vadd.f32 %v519, %v578
        %580 = vdwg.mxu0
        %v581 = vmax.f32 %v553, 0.0
        %v582 = vmax.f32 %v576, 0.0
        %v583 = vmax.f32 %v556, 0.0
        %v584 = vmax.f32 %v579, 0.0
        %v585 = vld [vmem:[%s3] sm:$0xff]
        %v586 = vld [vmem:[%s3 + $0x8] sm:$0x3]
        %587 = vset.pattern.permute.xlu0 2
        %588 = vperm.xlu0 %587, %v509
        %v589 = vpop.permute.xlu0 %588
        %591 = vset.pattern.permute.xlu0 2
        %592 = vperm.xlu0 %591, %v510
        %v593 = vpop.permute.xlu0 %592
        %vm595 = vcmask 80896
        %v597 = vsel %vm595, %v585, 0
        %v600 = vsel %vm595, %v586, 0
        %vm602 = vcmask 1041408
        %v604 = vsel %vm602, %v583, 0
        %v607 = vsel %vm602, %v584, 0
        %609 = vmatpush.msra.mxu0 0.0
        %610 = vmatpush.msra.mxu0 0.0
        %611 = vmatpush.msra.mxu0 0.0
        %612 = vmatpush.msra.mxu0 0.0
        %613 = vmatpush.msra.mxu0 0.0
        %614 = vmatpush.msra.mxu0 0.0
        %615 = vmatpush.msra.mxu0 0.0
        %616 = vmatpush.msra.mxu0 0.0
        %617 = vmatpush.msra.mxu0 0.0
        %618 = vmatpush.msra.mxu0 0.0
        %619 = vmatpush.msra.mxu0 0.0
        %620 = vmatpush.msra.mxu0 0.0
        %621 = vmatpush.msra.mxu0 0.0
        %622 = vmatpush.msra.mxu0 0.0
        %623 = vmatpush.msra.mxu0 %v604
        %624 = vmatpush.msra.mxu0 %v581
        %625 = vmatmul.f32.gmra.mxu0 %v597
        %v626 = vpop.f32.mrf.mxu0
        %v627 = vadd.f32 %v589, %v626
        %628 = vmatmul.f32.gmra.mxu0 %v600
        %v629 = vpop.f32.mrf.mxu0
        %v630 = vadd.f32 %v593, %v629
        %631 = vdwg.mxu0
        %632 = vmatpush.msra.mxu0 0.0
        %633 = vmatpush.msra.mxu0 0.0
        %634 = vmatpush.msra.mxu0 0.0
        %635 = vmatpush.msra.mxu0 0.0
        %636 = vmatpush.msra.mxu0 0.0
        %637 = vmatpush.msra.mxu0 0.0
        %638 = vmatpush.msra.mxu0 0.0
        %639 = vmatpush.msra.mxu0 0.0
        %640 = vmatpush.msra.mxu0 0.0
        %641 = vmatpush.msra.mxu0 0.0
        %642 = vmatpush.msra.mxu0 0.0
        %643 = vmatpush.msra.mxu0 0.0
        %644 = vmatpush.msra.mxu0 0.0
        %645 = vmatpush.msra.mxu0 0.0
        %646 = vmatpush.msra.mxu0 %v607
        %647 = vmatpush.msra.mxu0 %v582
        %648 = vmatmul.f32.gmra.mxu0 %v597
        %v649 = vpop.f32.mrf.mxu0
        %v650 = vadd.f32 %v589, %v649
        %651 = vmatmul.f32.gmra.mxu0 %v600
        %v652 = vpop.f32.mrf.mxu0
        %v653 = vadd.f32 %v593, %v652
        %654 = vdwg.mxu0
        %v655 = vmax.f32 %v627, 0.0
        %v656 = vmax.f32 %v650, 0.0
        %v657 = vmax.f32 %v630, 0.0
        %v658 = vmax.f32 %v653, 0.0
        %v659 = vld [vmem:[%s4] sm:$0x1]
        %v660 = vld [vmem:[%s5] sm:$0x1]
        %662 = vset.pattern.permute.xlu0 3
        %663 = vperm.xlu0 %662, %v660
        %v664 = vpop.permute.xlu0 %663
        %v667 = vsel %vm595, %v659, 0
        %v670 = vsel %vm602, %v657, 0
        %v673 = vsel %vm602, %v658, 0
        %675 = vmatpush.msra.mxu0 0.0
        %676 = vmatpush.msra.mxu0 0.0
        %677 = vmatpush.msra.mxu0 0.0
        %678 = vmatpush.msra.mxu0 0.0
        %679 = vmatpush.msra.mxu0 0.0
        %680 = vmatpush.msra.mxu0 0.0
        %681 = vmatpush.msra.mxu0 0.0
        %682 = vmatpush.msra.mxu0 0.0
        %683 = vmatpush.msra.mxu0 0.0
        %684 = vmatpush.msra.mxu0 0.0
        %685 = vmatpush.msra.mxu0 0.0
        %686 = vmatpush.msra.mxu0 0.0
        %687 = vmatpush.msra.mxu0 0.0
        %688 = vmatpush.msra.mxu0 0.0
        %689 = vmatpush.msra.mxu0 %v670
        %690 = vmatpush.msra.mxu0 %v655
        %691 = vmatmul.f32.gmra.mxu0 %v667
        %v692 = vpop.f32.mrf.mxu0
        %v693 = vadd.f32 %v664, %v692
        %694 = vdwg.mxu0
        %695 = vmatpush.msra.mxu0 0.0
        %696 = vmatpush.msra.mxu0 0.0
        %697 = vmatpush.msra.mxu0 0.0
        %698 = vmatpush.msra.mxu0 0.0
        %699 = vmatpush.msra.mxu0 0.0
        %700 = vmatpush.msra.mxu0 0.0
        %701 = vmatpush.msra.mxu0 0.0
        %702 = vmatpush.msra.mxu0 0.0
        %703 = vmatpush.msra.mxu0 0.0
        %704 = vmatpush.msra.mxu0 0.0
        %705 = vmatpush.msra.mxu0 0.0
        %706 = vmatpush.msra.mxu0 0.0
        %707 = vmatpush.msra.mxu0 0.0
        %708 = vmatpush.msra.mxu0 0.0
        %709 = vmatpush.msra.mxu0 %v673
        %710 = vmatpush.msra.mxu0 %v656
        %711 = vmatmul.f32.gmra.mxu0 %v667
        %v712 = vpop.f32.mrf.mxu0
        %v713 = vadd.f32 %v664, %v712
        %714 = vdwg.mxu0
        %v715 = vxor.u32 %v693, 2147483648
        %v716 = vxor.u32 %v713, 2147483648
        %v717 = vmul.f32 %v715, 1.442695
        %v718 = vpow.pop %v717
        %v719 = vmul.f32 %v716, 1.442695
        %v720 = vpow.pop %v719
        %v721 = vadd.f32 %v718, 1.0
        %v722 = vadd.f32 %v720, 1.0
        %v723 = vrcp.pop %v721
        %v724 = vmul.f32 %v721, %v723
        %v725 = vsub.f32 1.0, %v724
        %v726 = vmul.f32 %v723, %v725
        %v727 = vadd.f32 %v723, %v726
        %vm728 = vweird.f32 %v721
        %vm729 = vweird.f32 %v723
        %vm730 = vmor %vm728, %vm729
        %v731 = vsel %vm730, %v723, %v727
        %v732 = vand.u32 2147483647, %v721
        %vm733 = vcmp.eq.f32.partialorder %v732, 8.507059e+37
        %v734 = vand.u32 %v721, 2147483648
        %v735 = vor.u32 1.1754944e-38, %v734
        %v736 = vsel %vm733, %v735, %v731
        %v737 = vmul.f32 1.0, %v736
        %v738 = vrcp.pop %v722
        %v739 = vmul.f32 %v722, %v738
        %v740 = vsub.f32 1.0, %v739
        %v741 = vmul.f32 %v738, %v740
        %v742 = vadd.f32 %v738, %v741
        %vm743 = vweird.f32 %v722
        %vm744 = vweird.f32 %v738
        %vm745 = vmor %vm743, %vm744
        %v746 = vsel %vm745, %v738, %v742
        %v747 = vand.u32 2147483647, %v722
        %vm748 = vcmp.eq.f32.partialorder %v747, 8.507059e+37
        %v749 = vand.u32 %v722, 2147483648
        %v750 = vor.u32 1.1754944e-38, %v749
        %v751 = vsel %vm748, %v750, %v746
        %v752 = vmul.f32 1.0, %v751
        %v755 = vrot.slane %v752, 7
        %vm756 = vcmask 1040384
        %v757 = vsel %vm756, %v737, %v755
        %v759 = vlaneseq
        %vm760 = vcmp.ge.s32.totalorder %v759, 0
        %vm761 = vcmp.lt.s32.totalorder %v759, 256
        %vm762 = vmand %vm760, %vm761
        %763 = vst.msk [vmem:[%s257] sm:$0x3] %vm762, %v757
        %s764 = sand.u32 %s159, 1
        %s765 = scalar_lea.sflag [#allocation3], %s764
        %s766 = sand.u32 %s159, 1
        %s767 = smul.addr %s766, 2
        %s768 = scalar_lea.vmem [#allocation2], %s767
        // Predicated region
        $region45: #{tpu_custom_call.1} parent=43 // pred_check
          %p769 = pneg %p169
        $region46: #{tpu_custom_call.1} parent=43 // pred_check_branch
          %771 = sbr.rel (%p769) target = $region48
        $region47: #{tpu_custom_call.1} parent=43 // pred_region
          %773 = vsyncadd %s765, 0
          %s774 = smul.addr %s20, 2
          %s775 = scalar_lea.hbm %s6, %s774
          %s777 = sshll.u32 %s768, 4
          %s778 = int_to_ptr.vmem [resolvable:$true] %s777
          %s779 = sshll.u32 %s775, 4
          %s780 = int_to_ptr.hbm [resolvable:$true] %s779
          %782 = dma.vmem_to_hbm [thread:$0]  %s778, 32, %s780, %s765
        $region48: #{tpu_custom_call.1} parent=43 // pred_fallthru
          _
      $region44: #{tpu_custom_call.1} parent=5 // pred_fallthru
        _
      %p783 = scmp.le.s32.totalorder 2, %s15
      // Predicated region
      $region49: #{tpu_custom_call.1} parent=5 // pred_check
        %p784 = pneg %p783
      $region50: #{tpu_custom_call.1} parent=5 // pred_check_branch
        %786 = sbr.rel (%p784) target = $region52
      $region51: #{tpu_custom_call.1} parent=5 // pred_region
        %s787 = ssub.s32 %s15, 2
        // Predicated region
        $region53: #{tpu_custom_call.1} parent=51 // pred_check
          %p788 = pneg %p175
        $region54: #{tpu_custom_call.1} parent=51 // pred_check_branch
          %790 = sbr.rel (%p788) target = $region56
        $region55: #{tpu_custom_call.1} parent=51 // pred_region
          %s791 = sand.u32 %s160, 1
          %s792 = scalar_lea.sflag [#allocation3], %s791
          %s793 = sand.u32 %s160, 1
          %s794 = smul.addr %s793, 2
          %s795 = scalar_lea.vmem [#allocation2], %s794
          %797 = dma.done %s792, 32
        $region56: #{tpu_custom_call.1} parent=51 // pred_fallthru
          _
      $region52: #{tpu_custom_call.1} parent=5 // pred_fallthru
        _
    $region6: #{tpu_custom_call.1} parent=1 // loop_footer
      %s19 = sadd.s32 1, %s15
    $region7: #{tpu_custom_call.1} parent=1 // loop_footer_branch
      %14 = sbr.rel target = $region3
    $region8: #{tpu_custom_call.1} parent=1 // loop_exit
      _
    %798 = vsyncpa [#allocation3], 1
    %s799 = scalar_lea.sflag [#allocation3], 1
    %800 = vsyncpa %s799, 1

</llo_original>
